<compile_context>
chip_gen: v6e
topology: v6e:2x2x1
jax: 0.10.0
libtpu: 0.0.40
codegen_flags: <defaults>
</compile_context>

<pallas_src>
import functools

import jax
import jax.numpy as jnp
import numpy as np
from jax.experimental import pallas as pl
from jax.experimental.pallas import tpu as pltpu

ALPHA = 0.7
EPS = 1e-6

LANE = 128
SUB = 8
ACC_COLS = 4 * LANE  # [bce | intersection | sigmoid-sum | target-sum] lane slices


def _device_budgets():
    """Return (cores_to_split, input working-set budget, scoped-VMEM limit)."""
    kind = ""
    try:
        kind = jax.devices()[0].device_kind.lower()
    except Exception:  # defensive: fall back to conservative settings
        pass
    if ("v7" in kind) or ("7x" in kind) or ("tpu7" in kind):
        # v7x: 64 MiB VMEM per TensorCore, 2 TensorCores -> smaller buffers,
        # split the reduction across both cores.
        return 2, 24 * 1024 * 1024, 32 * 1024 * 1024
    # v5e / v6e: 128 MiB physical VMEM, single TensorCore.
    return 1, 48 * 1024 * 1024, 64 * 1024 * 1024


def _choose_tile(rows, tb, nb, nc, bytes_pair, budget):
    """Pick TK (sublane rows per block) for (TB, TK, 128) input blocks."""
    # VMEM cap: 2 inputs x 2 pipeline buffers per (TB, TK, 128) block.
    cap_vmem = budget // (2 * tb * LANE * bytes_pair)
    cap_vmem = max(SUB, (cap_vmem // SUB) * SUB)
    cap_vmem = min(cap_vmem, 1024)  # >=512 rows already ~85% of HBM roofline
    # Pipeline cap: keep >= ~4 blocks in flight per core (batch blocks count).
    min_k_steps = max(1, -(-4 // nb))
    cap_pipe = -(-rows // (nc * min_k_steps))
    cap_pipe = max(SUB, (-(-cap_pipe // SUB)) * SUB)
    # Never exceed the (8-rounded) row count.
    full = max(SUB, (-(-rows // SUB)) * SUB)
    return min(cap_vmem, cap_pipe, full)


def _combined_loss_kernel(p_ref, t_ref, acc_ref, *, spc, rows, mask):
    """p/t: (TB, TK, 128) tiles; acc: (TB, 8, 512) resident accumulator."""
    tb, tk, lane = p_ref.shape

    @pl.when(pl.program_id(2) == 0)
    def _():
        acc_ref[...] = jnp.zeros_like(acc_ref)

    x = p_ref[...].astype(jnp.float32)  # logits
    t = t_ref[...].astype(jnp.float32)  # targets

    if mask:
        # Unclamped global K-block index (the BlockSpec clamps; we mask).
        gk = pl.program_id(0) * spc + pl.program_id(2)
        row = gk * tk + jax.lax.broadcasted_iota(jnp.int32, (tb, tk, lane), 1)
        valid = row < rows
        # x = -1e4 -> exp(-|x|) underflows to exactly 0, so masked rows
        # contribute exactly zero to every accumulated quantity.
        x = jnp.where(valid, x, -1e4)
        t = jnp.where(valid, t, 0.0)

    # Share exp(-|x|) between the stable BCE log term and the sigmoid
    # (2 EUP transcendentals per element instead of 3).
    e = jnp.exp(-jnp.abs(x))
    # Stable BCE with logits: max(x,0) - x*t + log1p(exp(-|x|))
    bce = jnp.maximum(x, 0.0) - x * t + jnp.log1p(e)
    inv = pl.reciprocal(1.0 + e, approx=False)
    s = jnp.where(x >= 0.0, inv, e * inv)  # sigmoid(x)

    def psum(v):
        # TK -> 8 partial reduce: pure VALU vreg adds (no per-step XLU sublane
        # reduce); the final 8 -> 1 reduce happens once in the JAX epilogue.
        return jnp.sum(v.reshape(tb, tk // SUB, SUB, lane), axis=1)

    acc_ref[:, :, 0 * LANE:1 * LANE] += psum(bce)
    acc_ref[:, :, 1 * LANE:2 * LANE] += psum(s * t)
    acc_ref[:, :, 2 * LANE:3 * LANE] += psum(s)
    acc_ref[:, :, 3 * LANE:4 * LANE] += psum(t)


@functools.partial(
    jax.jit, static_argnames=("alpha", "eps", "nc", "budget", "vmem_limit"))
def _combined_loss_impl(preds, targets, *, alpha, eps, nc, budget, vmem_limit):
    assert preds.shape == targets.shape
    B = preds.shape[0]
    N = int(np.prod(preds.shape[1:]))

    p2 = preds.reshape(B, N)
    t2 = targets.reshape(B, N)

    rows = -(-N // LANE)  # sublane rows per sample
    if rows * LANE != N:
        # Lane-tail pad only (<=127 elems/sample); UNet mask shapes normally
        # never take this path.  The (much larger) K-axis raggedness is masked
        # inside the kernel instead of padding whole copies in HBM.
        p2 = jnp.pad(p2, ((0, 0), (0, rows * LANE - N)), constant_values=-1e4)
        t2 = jnp.pad(t2, ((0, 0), (0, rows * LANE - N)), constant_values=0)
    p3 = p2.reshape(B, rows, LANE)
    t3 = t2.reshape(B, rows, LANE)

    # Batch tile: decoupled from TK so TK stays roofline-sized at any batch.
    TB = max(d for d in range(1, min(B, 8) + 1) if B % d == 0)
    NB = B // TB

    bytes_pair = p3.dtype.itemsize + t3.dtype.itemsize
    TK = _choose_tile(rows, TB, NB, nc, bytes_pair, budget)
    NR = -(-rows // TK)            # input blocks present along the row axis
    spc = -(-NR // nc)             # K steps per core
    mask_needed = nc * spc * TK > rows
    clamp_needed = nc * spc > NR   # a core's tail block may be fully past NR
    last_blk = NR - 1

    if clamp_needed:
        def in_map(c, b, k):
            return (b, jnp.minimum(c * spc + k, last_blk), 0)
    else:
        def in_map(c, b, k):
            return (b, c * spc + k, 0)

    in_spec = pl.BlockSpec((TB, TK, LANE), in_map)
    out_spec = pl.BlockSpec((None, TB, SUB, ACC_COLS),
                            lambda c, b, k: (c, b, 0, 0))

    if nc == 2:
        sems = (pltpu.CORE_PARALLEL, pltpu.ARBITRARY, pltpu.ARBITRARY)
    else:
        sems = (pltpu.PARALLEL, pltpu.PARALLEL, pltpu.ARBITRARY)

    elems = B * N
    cost = pl.CostEstimate(
        flops=12 * elems,
        transcendentals=3 * elems,
        bytes_accessed=elems * bytes_pair + nc * B * SUB * ACC_COLS * 4,
    )

    kernel = functools.partial(
        _combined_loss_kernel, spc=spc, rows=rows, mask=mask_needed)

    acc = pl.pallas_call(
        kernel,
        out_shape=jax.ShapeDtypeStruct((nc, B, SUB, ACC_COLS), jnp.float32),
        grid_spec=pltpu.PrefetchScalarGridSpec(
            num_scalar_prefetch=0,
            grid=(nc, NB, spc),
            in_specs=[in_spec, in_spec],
            out_specs=out_spec,
        ),
        compiler_params=pltpu.CompilerParams(
            dimension_semantics=sems,
            vmem_limit_bytes=vmem_limit,
        ),
        cost_estimate=cost,
    )(p3, t3)

    # Tiny epilogue in plain JAX: fold per-core + per-sublane partials, then
    # the 128-lane reduces, the Dice ratio, and the alpha mix.
    acc = jnp.sum(acc, axis=(0, 2))                      # (B, 512)
    bce_sum = jnp.sum(acc[:, 0 * LANE:1 * LANE])
    inter = jnp.sum(acc[:, 1 * LANE:2 * LANE], axis=1)
    sig_sum = jnp.sum(acc[:, 2 * LANE:3 * LANE], axis=1)
    tgt_sum = jnp.sum(acc[:, 3 * LANE:4 * LANE], axis=1)

    bce_mean = bce_sum / jnp.float32(B * N)
    dice = (2.0 * inter + eps) / (sig_sum + tgt_sum + eps)
    dice_loss = 1.0 - jnp.mean(dice)
    return alpha * bce_mean + (1.0 - alpha) * dice_loss


def combined_loss(preds, targets, alpha=ALPHA, eps=EPS):
    nc, budget, vmem_limit = _device_budgets()
    try:
        return _combined_loss_impl(preds, targets, alpha=alpha, eps=eps,
                                   nc=nc, budget=budget, vmem_limit=vmem_limit)
    except Exception:
        if nc == 1:
            raise
        # TODO(synk): CORE_PARALLEL 2-core split rejected by this toolchain;
        # fall back to a single-core sequential grid (correct, ~half roofline).
        return _combined_loss_impl(preds, targets, alpha=alpha, eps=eps,
                                   nc=1, budget=budget, vmem_limit=vmem_limit)


def _reference_loss(preds, targets, alpha=ALPHA, eps=EPS):
    x = preds.astype(jnp.float32)
    t = targets.astype(jnp.float32)
    bce = jnp.mean(jnp.maximum(x, 0.0) - x * t + jnp.log1p(jnp.exp(-jnp.abs(x))))
    B = x.shape[0]
    s = jax.nn.sigmoid(x).reshape(B, -1)
    tt = t.reshape(B, -1)
    inter = jnp.sum(s * tt, axis=1)
    dice = (2.0 * inter + eps) / (jnp.sum(s, axis=1) + jnp.sum(tt, axis=1) + eps)
    return alpha * bce + (1.0 - alpha) * (1.0 - jnp.mean(dice))


if __name__ == "__main__":
    key = jax.random.PRNGKey(0)
    k1, k2 = jax.random.split(key)
    # Small segmentation-style shapes: batch=2, channels=4, spatial=16x16.
    preds = jax.random.normal(k1, (2, 4, 16, 16), dtype=jnp.float32)
    # Binary masks are exact in bf16 -> half the HBM bytes for targets.
    targets = (jax.random.uniform(k2, (2, 4, 16, 16)) > 0.5).astype(jnp.bfloat16)

    out = jax.block_until_ready(combined_loss(preds, targets))

    ref = _reference_loss(preds, targets)
    np.testing.assert_allclose(np.asarray(out), np.asarray(ref), rtol=1e-5, atol=1e-5)

    print("KERNEL_OK")
</pallas_src>

<mosaic_0001>
module attributes {stable_mosaic.version = 11 : i64} {
  func.func @_combined_loss_kernel(%arg0: i32, %arg1: i32, %arg2: i32, %arg3: memref<2x8x128xf32, #tpu.memory_space<vmem>>, %arg4: memref<2x8x128xbf16, #tpu.memory_space<vmem>>, %arg5: memref<1x2x8x512xf32, #tpu.memory_space<vmem>>) attributes {dimension_semantics = [#tpu.dimension_semantics<parallel>, #tpu.dimension_semantics<parallel>, #tpu.dimension_semantics<arbitrary>], iteration_bounds = array<i64: 1, 1, 1>, scalar_prefetch = 0 : i64, scratch_operands = 0 : i64, tpu.core_type = #tpu.core_type<tc>, window_params = [{transform_indices = @transform_0, window_bounds = array<i64: 2, 8, 128>}, {transform_indices = @transform_1, window_bounds = array<i64: 2, 8, 128>}, {transform_indices = @transform_2, window_bounds = array<i64: 1, 2, 8, 512>}]} {
    %c0_i32 = arith.constant 0 : i32
    %0 = arith.cmpi eq, %arg2, %c0_i32 : i32
    %1 = arith.extui %0 : i1 to i32
    %c0_i32_0 = arith.constant 0 : i32
    %2 = arith.cmpi ne, %1, %c0_i32_0 : i32
    scf.if %2 {
      %cst_42 = arith.constant 0.000000e+00 : f32
      %56 = vector.broadcast %cst_42 : f32 to vector<2x8x512xf32>
      %c0_43 = arith.constant 0 : index
      %c0_44 = arith.constant 0 : index
      %c0_45 = arith.constant 0 : index
      %c0_46 = arith.constant 0 : index
      %57 = vector.load %arg5[%c0_43, %c0_44, %c0_45, %c0_46] : memref<1x2x8x512xf32, #tpu.memory_space<vmem>>, vector<1x2x8x512xf32>
      %58 = vector.shape_cast %57 : vector<1x2x8x512xf32> to vector<2x8x512xf32>
      %59 = vector.shape_cast %56 : vector<2x8x512xf32> to vector<1x2x8x512xf32>
      tpu.vector_store %arg5[%c0_43, %c0_44, %c0_45, %c0_46], %59 {strides = array<i32>} : memref<1x2x8x512xf32, #tpu.memory_space<vmem>>, vector<1x2x8x512xf32>,
    } else {
    }
    %c0 = arith.constant 0 : index
    %c0_1 = arith.constant 0 : index
    %c0_2 = arith.constant 0 : index
    %3 = vector.load %arg3[%c0, %c0_1, %c0_2] : memref<2x8x128xf32, #tpu.memory_space<vmem>>, vector<2x8x128xf32>
    %c0_3 = arith.constant 0 : index
    %c0_4 = arith.constant 0 : index
    %c0_5 = arith.constant 0 : index
    %4 = vector.load %arg4[%c0_3, %c0_4, %c0_5] : memref<2x8x128xbf16, #tpu.memory_space<vmem>>, vector<2x8x128xbf16>
    %5 = arith.extf %4 : vector<2x8x128xbf16> to vector<2x8x128xf32>
    %6 = math.absf %3 : vector<2x8x128xf32>
    %cst = arith.constant 0.000000e+00 : f32
    %7 = vector.broadcast %cst : f32 to vector<2x8x128xf32>
    %8 = arith.subf %7, %6 : vector<2x8x128xf32>
    %9 = math.exp %8 : vector<2x8x128xf32>
    %cst_6 = arith.constant 0.000000e+00 : f32
    %10 = vector.broadcast %cst_6 : f32 to vector<2x8x128xf32>
    %11 = arith.maximumf %3, %10 : vector<2x8x128xf32>
    %12 = arith.mulf %3, %5 : vector<2x8x128xf32>
    %13 = arith.subf %11, %12 : vector<2x8x128xf32>
    %14 = math.log1p %9 : vector<2x8x128xf32>
    %15 = arith.addf %13, %14 : vector<2x8x128xf32>
    %cst_7 = arith.constant 1.000000e+00 : f32
    %16 = vector.broadcast %cst_7 : f32 to vector<2x8x128xf32>
    %17 = arith.addf %16, %9 : vector<2x8x128xf32>
    %18 = tpu.reciprocal %17 : vector<2x8x128xf32> -> vector<2x8x128xf32>
    %cst_8 = arith.constant 0.000000e+00 : f32
    %19 = vector.broadcast %cst_8 : f32 to vector<2x8x128xf32>
    %20 = arith.cmpf oge, %3, %19 : vector<2x8x128xf32>
    %21 = arith.mulf %9, %18 : vector<2x8x128xf32>
    %22 = arith.select %20, %18, %21 : vector<2x8x128xi1>, vector<2x8x128xf32>
    %c0_9 = arith.constant 0 : index
    %c0_10 = arith.constant 0 : index
    %c0_11 = arith.constant 0 : index
    %c0_12 = arith.constant 0 : index
    %23 = vector.load %arg5[%c0_9, %c0_10, %c0_11, %c0_12] : memref<1x2x8x512xf32, #tpu.memory_space<vmem>>, vector<1x2x8x128xf32>
    %24 = vector.shape_cast %23 : vector<1x2x8x128xf32> to vector<2x8x128xf32>
    %25 = vector.shape_cast %15 : vector<2x8x128xf32> to vector<2x1x8x128xf32>
    %cst_13 = arith.constant dense<0.000000e+00> : vector<2x8x128xf32>
    %26 = vector.multi_reduction <add>, %25, %cst_13 [1] : vector<2x1x8x128xf32> to vector<2x8x128xf32>
    %27 = arith.addf %24, %26 : vector<2x8x128xf32>
    %c0_14 = arith.constant 0 : index
    %c0_15 = arith.constant 0 : index
    %c0_16 = arith.constant 0 : index
    %c0_17 = arith.constant 0 : index
    %28 = vector.load %arg5[%c0_14, %c0_15, %c0_16, %c0_17] : memref<1x2x8x512xf32, #tpu.memory_space<vmem>>, vector<1x2x8x128xf32>
    %29 = vector.shape_cast %28 : vector<1x2x8x128xf32> to vector<2x8x128xf32>
    %30 = vector.shape_cast %27 : vector<2x8x128xf32> to vector<1x2x8x128xf32>
    tpu.vector_store %arg5[%c0_14, %c0_15, %c0_16, %c0_17], %30 {strides = array<i32>} : memref<1x2x8x512xf32, #tpu.memory_space<vmem>>, vector<1x2x8x128xf32>,
    %c0_18 = arith.constant 0 : index
    %c0_19 = arith.constant 0 : index
    %c0_20 = arith.constant 0 : index
    %c128 = arith.constant 128 : index
    %31 = vector.load %arg5[%c0_18, %c0_19, %c0_20, %c128] : memref<1x2x8x512xf32, #tpu.memory_space<vmem>>, vector<1x2x8x128xf32>
    %32 = vector.shape_cast %31 : vector<1x2x8x128xf32> to vector<2x8x128xf32>
    %33 = arith.mulf %22, %5 : vector<2x8x128xf32>
    %34 = vector.shape_cast %33 : vector<2x8x128xf32> to vector<2x1x8x128xf32>
    %cst_21 = arith.constant dense<0.000000e+00> : vector<2x8x128xf32>
    %35 = vector.multi_reduction <add>, %34, %cst_21 [1] : vector<2x1x8x128xf32> to vector<2x8x128xf32>
    %36 = arith.addf %32, %35 : vector<2x8x128xf32>
    %c0_22 = arith.constant 0 : index
    %c0_23 = arith.constant 0 : index
    %c0_24 = arith.constant 0 : index
    %c128_25 = arith.constant 128 : index
    %37 = vector.load %arg5[%c0_22, %c0_23, %c0_24, %c128_25] : memref<1x2x8x512xf32, #tpu.memory_space<vmem>>, vector<1x2x8x128xf32>
    %38 = vector.shape_cast %37 : vector<1x2x8x128xf32> to vector<2x8x128xf32>
    %39 = vector.shape_cast %36 : vector<2x8x128xf32> to vector<1x2x8x128xf32>
    tpu.vector_store %arg5[%c0_22, %c0_23, %c0_24, %c128_25], %39 {strides = array<i32>} : memref<1x2x8x512xf32, #tpu.memory_space<vmem>>, vector<1x2x8x128xf32>,
    %c0_26 = arith.constant 0 : index
    %c0_27 = arith.constant 0 : index
    %c0_28 = arith.constant 0 : index
    %c256 = arith.constant 256 : index
    %40 = vector.load %arg5[%c0_26, %c0_27, %c0_28, %c256] : memref<1x2x8x512xf32, #tpu.memory_space<vmem>>, vector<1x2x8x128xf32>
    %41 = vector.shape_cast %40 : vector<1x2x8x128xf32> to vector<2x8x128xf32>
    %42 = vector.shape_cast %22 : vector<2x8x128xf32> to vector<2x1x8x128xf32>
    %cst_29 = arith.constant dense<0.000000e+00> : vector<2x8x128xf32>
    %43 = vector.multi_reduction <add>, %42, %cst_29 [1] : vector<2x1x8x128xf32> to vector<2x8x128xf32>
    %44 = arith.addf %41, %43 : vector<2x8x128xf32>
    %c0_30 = arith.constant 0 : index
    %c0_31 = arith.constant 0 : index
    %c0_32 = arith.constant 0 : index
    %c256_33 = arith.constant 256 : index
    %45 = vector.load %arg5[%c0_30, %c0_31, %c0_32, %c256_33] : memref<1x2x8x512xf32, #tpu.memory_space<vmem>>, vector<1x2x8x128xf32>
    %46 = vector.shape_cast %45 : vector<1x2x8x128xf32> to vector<2x8x128xf32>
    %47 = vector.shape_cast %44 : vector<2x8x128xf32> to vector<1x2x8x128xf32>
    tpu.vector_store %arg5[%c0_30, %c0_31, %c0_32, %c256_33], %47 {strides = array<i32>} : memref<1x2x8x512xf32, #tpu.memory_space<vmem>>, vector<1x2x8x128xf32>,
    %c0_34 = arith.constant 0 : index
    %c0_35 = arith.constant 0 : index
    %c0_36 = arith.constant 0 : index
    %c384 = arith.constant 384 : index
    %48 = vector.load %arg5[%c0_34, %c0_35, %c0_36, %c384] : memref<1x2x8x512xf32, #tpu.memory_space<vmem>>, vector<1x2x8x128xf32>
    %49 = vector.shape_cast %48 : vector<1x2x8x128xf32> to vector<2x8x128xf32>
    %50 = vector.shape_cast %5 : vector<2x8x128xf32> to vector<2x1x8x128xf32>
    %cst_37 = arith.constant dense<0.000000e+00> : vector<2x8x128xf32>
    %51 = vector.multi_reduction <add>, %50, %cst_37 [1] : vector<2x1x8x128xf32> to vector<2x8x128xf32>
    %52 = arith.addf %49, %51 : vector<2x8x128xf32>
    %c0_38 = arith.constant 0 : index
    %c0_39 = arith.constant 0 : index
    %c0_40 = arith.constant 0 : index
    %c384_41 = arith.constant 384 : index
    %53 = vector.load %arg5[%c0_38, %c0_39, %c0_40, %c384_41] : memref<1x2x8x512xf32, #tpu.memory_space<vmem>>, vector<1x2x8x128xf32>
    %54 = vector.shape_cast %53 : vector<1x2x8x128xf32> to vector<2x8x128xf32>
    %55 = vector.shape_cast %52 : vector<2x8x128xf32> to vector<1x2x8x128xf32>
    tpu.vector_store %arg5[%c0_38, %c0_39, %c0_40, %c384_41], %55 {strides = array<i32>} : memref<1x2x8x512xf32, #tpu.memory_space<vmem>>, vector<1x2x8x128xf32>,
    return
  }
  func.func @transform_0(%arg0: i32, %arg1: i32, %arg2: i32) -> (i32, i32, i32) {
    %c1_i32 = arith.constant 1 : i32
    %0 = arith.muli %arg0, %c1_i32 : i32
    %1 = arith.addi %0, %arg2 : i32
    %c0_i32 = arith.constant 0 : i32
    %c0_i32_0 = arith.constant 0 : i32
    return %arg1, %1, %c0_i32 : i32, i32, i32
  }
  func.func @transform_1(%arg0: i32, %arg1: i32, %arg2: i32) -> (i32, i32, i32) {
    %c1_i32 = arith.constant 1 : i32
    %0 = arith.muli %arg0, %c1_i32 : i32
    %1 = arith.addi %0, %arg2 : i32
    %c0_i32 = arith.constant 0 : i32
    %c0_i32_0 = arith.constant 0 : i32
    return %arg1, %1, %c0_i32 : i32, i32, i32
  }
  func.func @transform_2(%arg0: i32, %arg1: i32, %arg2: i32) -> (i32, i32, i32, i32) {
    %c0_i32 = arith.constant 0 : i32
    %c0_i32_0 = arith.constant 0 : i32
    %c0_i32_1 = arith.constant 0 : i32
    return %arg0, %arg1, %c0_i32, %c0_i32_0 : i32, i32, i32, i32
  }
}

</mosaic_0001>

<llo_original>
// kernel: _combined_loss_impl.1
$region0: #{_combined_loss_impl.1}
  #allocation0 [shape = 'u32[]', space=smem, size = 0x4, offset = 0x4, fixed_abs, tag = 'smem constant byte address 0x4 - core index']
  #allocation1 [shape = 'u32[144,128]{1,0:T(1,128)}', space=vmem, size = 0x12000, scoped, tag = 'internal scratch']
  %s0 = inlined_call_operand.vmem [shape: f32[2,8,128], index: 0, kind: input, shape index: {}]
  %s1 = inlined_call_operand.vmem [shape: bf16[2,8,128], index: 1, kind: input, shape index: {}]
  %s2 = inlined_call_operand.vmem [shape: f32[1,2,8,512], index: 2, kind: output, shape index: {}]
  %s3 = sld [smem:[#allocation0]]
  $region22: #{_combined_loss_impl.1} parent=0
    _
  %s5 = ssub.s32 1, %s3
  %s6 = scalar_select 0, %s5, %s3
  // Predicated region
  $region2: #{_combined_loss_impl.1} parent=0 // pred_check
    _
  $region3: #{_combined_loss_impl.1} parent=0 // pred_check_branch
    %8 = sbr.rel (0) target = $region5
  $region4: #{_combined_loss_impl.1} parent=0 // pred_region
    %s9 = sadd.s32 0, 0
    %p10 = scmp.lt.s32.totalorder %s9, 0
    %s11 = scalar_select %p10, %s9, 0
    %s12 = smul.addr %s11, 8
    %s13 = scalar_lea.vmem %s0, %s12
    %s14 = sadd.s32 0, 0
  $region5: #{_combined_loss_impl.1} parent=0 // pred_fallthru
    _
  // Predicated region
  $region6: #{_combined_loss_impl.1} parent=0 // pred_check
    _
  $region7: #{_combined_loss_impl.1} parent=0 // pred_check_branch
    %16 = sbr.rel (0) target = $region9
  $region8: #{_combined_loss_impl.1} parent=0 // pred_region
    %s17 = sadd.s32 0, 0
    %p18 = scmp.lt.s32.totalorder %s17, 0
    %s19 = scalar_select %p18, %s17, 0
    %s20 = smul.addr %s19, 4
    %s21 = scalar_lea.vmem %s1, %s20
    %s22 = sadd.s32 0, 0
  $region9: #{_combined_loss_impl.1} parent=0 // pred_fallthru
    _
  %s23 = sadd.s32 0, 0
  %p24 = scmp.lt.s32.totalorder %s23, 0
  %s25 = scalar_select %p24, %s23, 0
  %s26 = smul.addr %s25, 8
  %s27 = scalar_lea.vmem %s0, %s26
  %s28 = sadd.s32 0, 0
  %p29 = scmp.lt.s32.totalorder %s28, 0
  %s30 = scalar_select %p29, %s28, 0
  %s31 = smul.addr %s30, 4
  %s32 = scalar_lea.vmem %s1, %s31
  %s33 = sadd.s32 0, 0
  %p34 = scmp.lt.s32.totalorder %s33, 0
  %s35 = scalar_select %p34, %s33, 0
  %s36 = smul.addr %s35, 8
  %s37 = scalar_lea.vmem %s0, %s36
  %s38 = sadd.s32 0, 0
  %s39 = sadd.s32 0, 0
  %p40 = scmp.lt.s32.totalorder %s39, 0
  %s41 = scalar_select %p40, %s39, 0
  %s42 = smul.addr %s41, 4
  %s43 = scalar_lea.vmem %s1, %s42
  %s44 = sadd.s32 0, 0
  %p45 = scmp.eq.s32.totalorder 0, 0
  // Predicated region
  $region10: #{_combined_loss_impl.1} parent=0 // pred_check
    %p46 = pneg %p45
  $region11: #{_combined_loss_impl.1} parent=0 // pred_check_branch
    %48 = sbr.rel (%p46) target = $region13
  $region12: #{_combined_loss_impl.1} parent=0 // pred_region
    %49 = vst [vmem:[%s2] sm:$0xff] 0.0
    %50 = vst [vmem:[%s2 + $0x8] sm:$0xff] 0.0
    %51 = vst [vmem:[%s2 + $0x10] sm:$0xff] 0.0
    %52 = vst [vmem:[%s2 + $0x18] sm:$0xff] 0.0
    %53 = vst [vmem:[%s2 + $0x20] sm:$0xff] 0.0
    %54 = vst [vmem:[%s2 + $0x28] sm:$0xff] 0.0
    %55 = vst [vmem:[%s2 + $0x30] sm:$0xff] 0.0
    %56 = vst [vmem:[%s2 + $0x38] sm:$0xff] 0.0
  $region13: #{_combined_loss_impl.1} parent=0 // pred_fallthru
    _
  %v57 = vld [vmem:[%s37] sm:$0xff]
  %v58 = vld [vmem:[%s37 + $0x8] sm:$0xff]
  %v59 = vld [vmem:[%s43] sm:$0xf]
  %v60 = vld [vmem:[%s43 + $0x4] sm:$0xf]
  %v61 = vunpack.c.l.bf16 %v59
  %v62 = vunpack.c.l.bf16 %v60
  %v63 = vand.u32 2147483647, %v57
  %v64 = vand.u32 2147483647, %v58
  %v65 = vsub.f32 0.0, %v63
  %v66 = vsub.f32 0.0, %v64
  %v67 = vmul.f32 %v65, 1.442695
  %v68 = vpow.pop %v67
  %v69 = vmul.f32 %v66, 1.442695
  %v70 = vpow.pop %v69
  %v71 = vmax.f32 %v57, 0.0
  %v72 = vmax.f32 %v58, 0.0
  %v73 = vmul.f32 %v57, %v61
  %v74 = vmul.f32 %v58, %v62
  %v75 = vsub.f32 %v71, %v73
  %v76 = vsub.f32 %v72, %v74
  %v77 = vadd.f32 %v68, 1.0
  %v78 = vlog2.pop %v77
  %v79 = vmul.f32 %v78, 0.6931472
  %v80 = vmul.f32 -0.5, %v68
  %v81 = vadd.f32 %v80, 1.0
  %v82 = vmul.f32 %v81, %v68
  %v83 = vand.u32 2147483647, %v68
  %vm84 = vcmp.lt.f32.partialorder %v83, 0.0004427343
  %v85 = vsel %vm84, %v82, %v79
  %v86 = vadd.f32 %v70, 1.0
  %v87 = vlog2.pop %v86
  %v88 = vmul.f32 %v87, 0.6931472
  %v89 = vmul.f32 -0.5, %v70
  %v90 = vadd.f32 %v89, 1.0
  %v91 = vmul.f32 %v90, %v70
  %v92 = vand.u32 2147483647, %v70
  %vm93 = vcmp.lt.f32.partialorder %v92, 0.0004427343
  %v94 = vsel %vm93, %v91, %v88
  %v95 = vadd.f32 %v75, %v85
  %v96 = vadd.f32 %v76, %v94
  %v97 = vadd.f32 %v68, 1.0
  %v98 = vadd.f32 %v70, 1.0
  %v99 = vrcp.pop %v97
  %v100 = vrcp.pop %v98
  %vm101 = vcmp.ge.f32.partialorder %v57, 0.0
  %vm102 = vcmp.ge.f32.partialorder %v58, 0.0
  %v103 = vmul.f32 %v68, %v99
  %v104 = vmul.f32 %v70, %v100
  %v105 = vsel %vm101, %v99, %v103
  %v106 = vsel %vm102, %v100, %v104
  %v107 = vld [vmem:[%s2] sm:$0xff]
  %v108 = vld [vmem:[%s2 + $0x20] sm:$0xff]
  %v109 = vadd.f32 %v95, 0.0
  %v110 = vadd.f32 %v96, 0.0
  %v111 = vadd.f32 %v107, %v109
  %v112 = vadd.f32 %v108, %v110
  %113 = vst [vmem:[%s2] sm:$0xff] %v111
  %114 = vst [vmem:[%s2 + $0x20] sm:$0xff] %v112
  %v115 = vld [vmem:[%s2 + $0x8] sm:$0xff]
  %v116 = vld [vmem:[%s2 + $0x28] sm:$0xff]
  %v117 = vmul.f32 %v105, %v61
  %v118 = vmul.f32 %v106, %v62
  %v119 = vadd.f32 %v117, 0.0
  %v120 = vadd.f32 %v118, 0.0
  %v121 = vadd.f32 %v115, %v119
  %v122 = vadd.f32 %v116, %v120
  %123 = vst [vmem:[%s2 + $0x8] sm:$0xff] %v121
  %124 = vst [vmem:[%s2 + $0x28] sm:$0xff] %v122
  %v125 = vld [vmem:[%s2 + $0x10] sm:$0xff]
  %v126 = vld [vmem:[%s2 + $0x30] sm:$0xff]
  %v127 = vadd.f32 %v105, 0.0
  %v128 = vadd.f32 %v106, 0.0
  %v129 = vadd.f32 %v125, %v127
  %v130 = vadd.f32 %v126, %v128
  %131 = vst [vmem:[%s2 + $0x10] sm:$0xff] %v129
  %132 = vst [vmem:[%s2 + $0x30] sm:$0xff] %v130
  %v133 = vld [vmem:[%s2 + $0x18] sm:$0xff]
  %v134 = vld [vmem:[%s2 + $0x38] sm:$0xff]
  %v135 = vadd.f32 %v61, 0.0
  %v136 = vadd.f32 %v62, 0.0
  %v137 = vadd.f32 %v133, %v135
  %v138 = vadd.f32 %v134, %v136
  %139 = vst [vmem:[%s2 + $0x18] sm:$0xff] %v137
  %140 = vst [vmem:[%s2 + $0x38] sm:$0xff] %v138
  // Predicated region
  $region14: #{_combined_loss_impl.1} parent=0 // pred_check
    _
  $region15: #{_combined_loss_impl.1} parent=0 // pred_check_branch
    %142 = sbr.rel (0) target = $region17
  $region16: #{_combined_loss_impl.1} parent=0 // pred_region
    _
  $region17: #{_combined_loss_impl.1} parent=0 // pred_fallthru
    _
  // Predicated region
  $region18: #{_combined_loss_impl.1} parent=0 // pred_check
    _
  $region19: #{_combined_loss_impl.1} parent=0 // pred_check_branch
    %144 = sbr.rel (0) target = $region21
  $region20: #{_combined_loss_impl.1} parent=0 // pred_region
    _
  $region21: #{_combined_loss_impl.1} parent=0 // pred_fallthru
    _

</llo_original>
